<compile_context>
chip_gen: v7x
topology: tpu7x:2x2x1
jax: 0.10.0
libtpu: 0.0.40
codegen_flags: <defaults>
</compile_context>

<pallas_src>
import functools

import jax
import jax.numpy as jnp
from jax import lax
from jax.experimental import pallas as pl
from jax.experimental.pallas import tpu as pltpu


@functools.lru_cache(maxsize=None)
def _num_tensorcores() -> int:
    """TensorCores per exposed device: 2 on megacore chips, else 1."""
    try:
        kind = jax.devices()[0].device_kind.lower()
        if ("v7" in kind) or ("v4" in kind) or ("v5p" in kind):
            return 2
    except Exception:
        pass
    return 1


def _make_ssd_kernel(n_splits, tiles_per_split, tile_rows, rows_valid, need_mask):
    """Builds the sum((x-y)^2) streaming kernel.

    Per-split partial sums land in an (8,128) f32 slab (lane-dense store);
    the wrapper does the final cross-lane reduce.
    """

    def kernel(x_ref, y_ref, o_ref, acc_ref):
        if n_splits > 1:
            s = pl.program_id(0)
            k = pl.program_id(1)
        else:
            s = 0
            k = pl.program_id(0)

        @pl.when(k == 0)
        def _init():
            acc_ref[...] = jnp.zeros_like(acc_ref)

        d = x_ref[...].astype(jnp.float32) - y_ref[...].astype(jnp.float32)
        sq = d * d

        def fold(vals):
            # (tile_rows,128) -> (8,128) with pure VPU adds (no XLU per step).
            acc_ref[...] += jnp.sum(vals.reshape(-1, 8, 128), axis=0)

        if need_mask:
            base_row = (s * tiles_per_split + k) * tile_rows
            is_full = (base_row + tile_rows) <= rows_valid

            @pl.when(is_full)
            def _full_tile():
                fold(sq)

            @pl.when(jnp.logical_not(is_full))
            def _ragged_tile():
                # Zero out rows past the true row count (Pallas padding rows
                # of the last block, and whole padding tiles on odd splits).
                row_ids = base_row + lax.broadcasted_iota(
                    jnp.int32, (tile_rows, 128), 0)
                fold(jnp.where(row_ids < rows_valid, sq, 0.0))
        else:
            fold(sq)

        @pl.when(k == tiles_per_split - 1)
        def _finalize():
            o_ref[0] = acc_ref[...]

    return kernel


def image_loss(x: jax.Array, y: jax.Array, *, tile_bytes: int = 2 * 1024 * 1024) -> jax.Array:
    """MSE(x, y) with reduction='mean' — matches nn.MSELoss() forward."""
    assert x.shape == y.shape, "ImageLoss expects aligned images"
    # Mixed dtypes: promote both (accumulation is f32 in-kernel regardless).
    if x.dtype != y.dtype:
        ct = jnp.promote_types(x.dtype, y.dtype)
        x = x.astype(ct)
        y = y.astype(ct)

    total = x.size
    lane = 128
    itemsize = int(jnp.dtype(x.dtype).itemsize)

    # Sub-32-bit dtypes pack along sublanes: keep row tiles a multiple of the
    # packed sublane count (8 for f32, 16 for bf16, 32 for int8).
    packing = max(1, 4 // max(1, itemsize))
    sub = 8 * packing

    xf = x.reshape(-1)
    yf = y.reshape(-1)

    rows = total // lane
    bulk = rows * lane  # elements covered by the Pallas kernel

    # Reduction tile: ~tile_bytes per input per step (4096 rows f32 /
    # 8192 rows bf16) -> 2 inputs x 2 pipeline buffers ~= 8 MiB of VMEM.
    tr = max(sub, tile_bytes // (lane * itemsize))
    tr = min(tr, rows)
    tr -= tr % sub

    bulk_sum = jnp.float32(0.0)
    if tr >= sub:
        n_tiles = pl.cdiv(rows, tr)

        # Split rows across TensorCores on 2-TC chips; CORE_PARALLEL is what
        # actually shards a grid axis across cores.
        n_splits = 2 if (_num_tensorcores() >= 2 and n_tiles >= 2) else 1
        tiles_per_split = pl.cdiv(n_tiles, n_splits)
        padded_tiles = n_splits * tiles_per_split
        need_mask = (rows % tr != 0) or (padded_tiles != n_tiles)

        if bulk == total:
            # Zero-copy reshape: the ragged last tile is masked in-kernel, so
            # there is no wrapper-side bulk slice / hidden HBM copy.
            x2d = xf.reshape(rows, lane)
            y2d = yf.reshape(rows, lane)
        else:
            # Rare: element count not a multiple of 128. Only the <128-element
            # remainder goes to the wrapper tail; this slice may copy.
            x2d = xf[:bulk].reshape(rows, lane)
            y2d = yf[:bulk].reshape(rows, lane)

        last_tile = n_tiles - 1
        if padded_tiles != n_tiles:
            # Clamp padding tiles onto the last real block; the in-kernel mask
            # (computed from the UNclamped tile index) zeroes their contribution.
            def in_map_2d(s, k):
                return (jnp.minimum(s * tiles_per_split + k, last_tile), 0)
        else:
            def in_map_2d(s, k):
                return (s * tiles_per_split + k, 0)

        if n_splits > 1:
            grid = (n_splits, tiles_per_split)
            in_map = in_map_2d
            out_map = lambda s, k: (s, 0, 0)
            dims = (pltpu.CORE_PARALLEL, pltpu.ARBITRARY)
        else:
            grid = (tiles_per_split,)
            in_map = lambda k: in_map_2d(0, k)
            out_map = lambda k: (0, 0, 0)
            dims = (pltpu.ARBITRARY,)

        kernel = _make_ssd_kernel(n_splits, tiles_per_split, tr, rows, need_mask)

        partials = pl.pallas_call(
            kernel,
            out_shape=jax.ShapeDtypeStruct((n_splits, 8, lane), jnp.float32),
            grid_spec=pltpu.PrefetchScalarGridSpec(
                num_scalar_prefetch=0,
                grid=grid,
                in_specs=[
                    pl.BlockSpec((tr, lane), in_map),
                    pl.BlockSpec((tr, lane), in_map),
                ],
                out_specs=pl.BlockSpec((1, 8, lane), out_map),
                scratch_shapes=[pltpu.VMEM((8, lane), jnp.float32)],
            ),
            compiler_params=pltpu.CompilerParams(dimension_semantics=dims),
            cost_estimate=pl.CostEstimate(
                flops=3 * bulk,
                transcendentals=0,
                bytes_accessed=2 * bulk * itemsize + n_splits * 8 * lane * 4),
        )(x2d, y2d)
        bulk_sum = jnp.sum(partials)
    else:
        bulk = 0

    # Ragged tail past the last full 128-lane row (fewer than 128 elements, or
    # everything for tiny inputs): plain JAX sum in the wrapper.
    if bulk < total:
        dt = xf[bulk:].astype(jnp.float32) - yf[bulk:].astype(jnp.float32)
        tail_sum = jnp.sum(dt * dt)
    else:
        tail_sum = jnp.float32(0.0)

    return (bulk_sum + tail_sum) / jnp.float32(total)


if __name__ == "__main__":
    key = jax.random.PRNGKey(0)
    k1, k2, k3, k4, k5, k6 = jax.random.split(key, 6)

    # Primary case: small NCHW image pair (lane-aligned path).
    x = jax.random.normal(k1, (2, 4, 16, 16), dtype=jnp.float32)
    y = jax.random.normal(k2, (2, 4, 16, 16), dtype=jnp.float32)
    loss = jax.block_until_ready(image_loss(x, y))
    ref = jnp.mean((x - y) ** 2)
    assert jnp.allclose(loss, ref, rtol=1e-5, atol=1e-6), (loss, ref)

    # Ragged case: element count not tile/lane aligned -> exercises the
    # in-kernel row mask and the wrapper tail.
    xr = jax.random.normal(k3, (2, 3, 20, 20), dtype=jnp.float32)
    yr = jax.random.normal(k4, (2, 3, 20, 20), dtype=jnp.float32)
    loss_r = jax.block_until_ready(image_loss(xr, yr))
    ref_r = jnp.mean((xr - yr) ** 2)
    assert jnp.allclose(loss_r, ref_r, rtol=1e-5, atol=1e-6), (loss_r, ref_r)

    # bf16 case: exercises sublane packing (sub=16) and the in-kernel f32 cast.
    xb = jax.random.normal(k5, (2, 4, 16, 16), dtype=jnp.bfloat16)
    yb = jax.random.normal(k6, (2, 4, 16, 16), dtype=jnp.bfloat16)
    loss_b = jax.block_until_ready(image_loss(xb, yb))
    ref_b = jnp.mean((xb.astype(jnp.float32) - yb.astype(jnp.float32)) ** 2)
    assert jnp.allclose(loss_b, ref_b, rtol=1e-4, atol=1e-5), (loss_b, ref_b)

    print("KERNEL_OK")
</pallas_src>

<mosaic_0001>
module attributes {stable_mosaic.version = 11 : i64} {
  func.func @kernel(%arg0: i32, %arg1: memref<16x128xf32, #tpu.memory_space<vmem>>, %arg2: memref<16x128xf32, #tpu.memory_space<vmem>>, %arg3: memref<1x8x128xf32, #tpu.memory_space<vmem>>, %arg4: memref<8x128xf32, #tpu.memory_space<vmem>>) attributes {dimension_semantics = [#tpu.dimension_semantics<arbitrary>], iteration_bounds = array<i64: 1>, scalar_prefetch = 0 : i64, scratch_operands = 1 : i64, tpu.core_type = #tpu.core_type<tc>, window_params = [{transform_indices = @transform_0, window_bounds = array<i64: 16, 128>}, {transform_indices = @transform_1, window_bounds = array<i64: 16, 128>}, {pipeline_mode = #tpu.pipeline_mode<synchronous>, transform_indices = @transform_2, window_bounds = array<i64: 1, 8, 128>}]} {
    %c0_i32 = arith.constant 0 : i32
    %0 = arith.cmpi eq, %arg0, %c0_i32 : i32
    %1 = arith.extui %0 : i1 to i32
    %c0_i32_0 = arith.constant 0 : i32
    %2 = arith.cmpi ne, %1, %c0_i32_0 : i32
    scf.if %2 {
      %cst_10 = arith.constant 0.000000e+00 : f32
      %15 = vector.broadcast %cst_10 : f32 to vector<8x128xf32>
      %c0_11 = arith.constant 0 : index
      %c0_12 = arith.constant 0 : index
      %16 = vector.load %arg4[%c0_11, %c0_12] : memref<8x128xf32, #tpu.memory_space<vmem>>, vector<8x128xf32>
      tpu.vector_store %arg4[%c0_11, %c0_12], %15 {strides = array<i32>} : memref<8x128xf32, #tpu.memory_space<vmem>>, vector<8x128xf32>,
    } else {
    }
    %c0 = arith.constant 0 : index
    %c0_1 = arith.constant 0 : index
    %3 = vector.load %arg1[%c0, %c0_1] : memref<16x128xf32, #tpu.memory_space<vmem>>, vector<16x128xf32>
    %c0_2 = arith.constant 0 : index
    %c0_3 = arith.constant 0 : index
    %4 = vector.load %arg2[%c0_2, %c0_3] : memref<16x128xf32, #tpu.memory_space<vmem>>, vector<16x128xf32>
    %5 = arith.subf %3, %4 : vector<16x128xf32>
    %6 = arith.mulf %5, %5 : vector<16x128xf32>
    %c0_4 = arith.constant 0 : index
    %c0_5 = arith.constant 0 : index
    %7 = vector.load %arg4[%c0_4, %c0_5] : memref<8x128xf32, #tpu.memory_space<vmem>>, vector<8x128xf32>
    %8 = vector.shape_cast %6 : vector<16x128xf32> to vector<2x8x128xf32>
    %cst = arith.constant dense<0.000000e+00> : vector<8x128xf32>
    %9 = vector.multi_reduction <add>, %8, %cst [0] : vector<2x8x128xf32> to vector<8x128xf32>
    %10 = arith.addf %7, %9 : vector<8x128xf32>
    %c0_6 = arith.constant 0 : index
    %c0_7 = arith.constant 0 : index
    %11 = vector.load %arg4[%c0_6, %c0_7] : memref<8x128xf32, #tpu.memory_space<vmem>>, vector<8x128xf32>
    tpu.vector_store %arg4[%c0_6, %c0_7], %10 {strides = array<i32>} : memref<8x128xf32, #tpu.memory_space<vmem>>, vector<8x128xf32>,
    %c0_i32_8 = arith.constant 0 : i32
    %12 = arith.cmpi eq, %arg0, %c0_i32_8 : i32
    %13 = arith.extui %12 : i1 to i32
    %c0_i32_9 = arith.constant 0 : i32
    %14 = arith.cmpi ne, %13, %c0_i32_9 : i32
    scf.if %14 {
      %c0_10 = arith.constant 0 : index
      %c0_11 = arith.constant 0 : index
      %15 = vector.load %arg4[%c0_10, %c0_11] : memref<8x128xf32, #tpu.memory_space<vmem>>, vector<8x128xf32>
      %c0_12 = arith.constant 0 : index
      %c0_13 = arith.constant 0 : index
      %c0_14 = arith.constant 0 : index
      %16 = vector.load %arg3[%c0_12, %c0_13, %c0_14] : memref<1x8x128xf32, #tpu.memory_space<vmem>>, vector<1x8x128xf32>
      %17 = vector.shape_cast %16 : vector<1x8x128xf32> to vector<8x128xf32>
      %18 = vector.shape_cast %15 : vector<8x128xf32> to vector<1x8x128xf32>
      tpu.vector_store %arg3[%c0_12, %c0_13, %c0_14], %18 {strides = array<i32>} : memref<1x8x128xf32, #tpu.memory_space<vmem>>, vector<1x8x128xf32>,
    } else {
    }
    return
  }
  func.func @transform_0(%arg0: i32) -> (i32, i32) {
    %c0_i32 = arith.constant 0 : i32
    %0 = arith.addi %c0_i32, %arg0 : i32
    %c0_i32_0 = arith.constant 0 : i32
    %c0_i32_1 = arith.constant 0 : i32
    return %0, %c0_i32_0 : i32, i32
  }
  func.func @transform_1(%arg0: i32) -> (i32, i32) {
    %c0_i32 = arith.constant 0 : i32
    %0 = arith.addi %c0_i32, %arg0 : i32
    %c0_i32_0 = arith.constant 0 : i32
    %c0_i32_1 = arith.constant 0 : i32
    return %0, %c0_i32_0 : i32, i32
  }
  func.func @transform_2(%arg0: i32) -> (i32, i32, i32) {
    %c0_i32 = arith.constant 0 : i32
    %c0_i32_0 = arith.constant 0 : i32
    %c0_i32_1 = arith.constant 0 : i32
    %c0_i32_2 = arith.constant 0 : i32
    return %c0_i32, %c0_i32_0, %c0_i32_1 : i32, i32, i32
  }
}

</mosaic_0001>

<llo_original>
// kernel: tpu_custom_call.1
$region0: #{tpu_custom_call.1}
  #allocation0 [shape = 'u32[]', space=smem, size = 0x4, offset = 0x4, fixed_abs, tag = 'smem constant byte address 0x4 - core index']
  #allocation1 [shape = 'u32[144,128]{1,0:T(1,128)}', space=vmem, size = 0x12000, scoped, tag = 'internal scratch']
  #allocation2 [shape = 'f32[8,128]{1,0:T(8,128)}', space=vmem, size = 0x1000, scoped, tag = 'scratch operand']
  %s0 = inlined_call_operand.hbm [shape: f32[16,128], index: 0, kind: input, shape index: {}]
  %s1 = inlined_call_operand.hbm [shape: f32[16,128], index: 1, kind: input, shape index: {}]
  %s2 = inlined_call_operand.hbm [shape: f32[1,8,128], index: 2, kind: output, shape index: {}]
  %s3 = sld [smem:[#allocation0]]
  $region34: #{tpu_custom_call.1} parent=0
    _
  %s5 = ssub.s32 1, %s3
  %s6 = scalar_select 0, %s5, %s3
  $region1: #{tpu_custom_call.1} parent=0
    #allocation3 [shape = 'u8[8192]{0}', space=vmem, size = 0x2000, scoped, tag = 'input window, operand 0, single buffered']
    #allocation4 [shape = 's32[1]{0}', space=sflag, size = 0x4, scoped, tag = 'scoped memory for tpu_custom_call.1']
    #allocation5 [shape = 's32[1]{0}', space=sflag, size = 0x4, scoped, tag = 'scoped memory for tpu_custom_call.1']
    #allocation6 [shape = 'u8[8192]{0}', space=vmem, size = 0x2000, scoped, tag = 'input window, operand 1, single buffered']
    #allocation7 [shape = 's32[1]{0}', space=sflag, size = 0x4, scoped, tag = 'scoped memory for tpu_custom_call.1']
    #allocation8 [shape = 'u8[4096]{0}', space=vmem, size = 0x1000, scoped, tag = 'output window, operand 0, single buffered']
    %7 = vsyncpa [#allocation4], 0
    %8 = vsyncpa [#allocation7], 0
    %9 = vsyncpa [#allocation5], 0
    // Predicated region
    $region2: #{tpu_custom_call.1} parent=1 // pred_check
      _
    $region3: #{tpu_custom_call.1} parent=1 // pred_check_branch
      %11 = sbr.rel (0) target = $region5
    $region4: #{tpu_custom_call.1} parent=1 // pred_region
      %s13 = ssub.s32 256, 256
      %14 = vsyncadd [#allocation4], %s13
      %s15 = sshll.u32 [#allocation3], 4
      %s16 = int_to_ptr.vmem [resolvable:$true] %s15
      %21 = dma.hbm_to_vmem [thread:$0]  %s0, 256, %s16, [#allocation4], 128, 128, 8
    $region5: #{tpu_custom_call.1} parent=1 // pred_fallthru
      _
    // Predicated region
    $region6: #{tpu_custom_call.1} parent=1 // pred_check
      _
    $region7: #{tpu_custom_call.1} parent=1 // pred_check_branch
      %23 = sbr.rel (0) target = $region9
    $region8: #{tpu_custom_call.1} parent=1 // pred_region
      %s25 = ssub.s32 256, 256
      %26 = vsyncadd [#allocation7], %s25
      %s27 = sshll.u32 [#allocation6], 4
      %s28 = int_to_ptr.vmem [resolvable:$true] %s27
      %33 = dma.hbm_to_vmem [thread:$0]  %s1, 256, %s28, [#allocation7], 128, 128, 8
    $region9: #{tpu_custom_call.1} parent=1 // pred_fallthru
      _
    // Predicated region
    $region10: #{tpu_custom_call.1} parent=1 // pred_check
      _
    $region11: #{tpu_custom_call.1} parent=1 // pred_check_branch
      %35 = sbr.rel (0) target = $region13
    $region12: #{tpu_custom_call.1} parent=1 // pred_region
      %36 = dma.done [#allocation4], 256
    $region13: #{tpu_custom_call.1} parent=1 // pred_fallthru
      _
    // Predicated region
    $region14: #{tpu_custom_call.1} parent=1 // pred_check
      _
    $region15: #{tpu_custom_call.1} parent=1 // pred_check_branch
      %38 = sbr.rel (0) target = $region17
    $region16: #{tpu_custom_call.1} parent=1 // pred_region
      %39 = dma.done [#allocation7], 256
    $region17: #{tpu_custom_call.1} parent=1 // pred_fallthru
      _
    %p40 = scmp.eq.s32.totalorder 0, 0
    // Predicated region
    $region18: #{tpu_custom_call.1} parent=1 // pred_check
      %p41 = pneg %p40
    $region19: #{tpu_custom_call.1} parent=1 // pred_check_branch
      %43 = sbr.rel (%p41) target = $region21
    $region20: #{tpu_custom_call.1} parent=1 // pred_region
      %44 = vst [vmem:[#allocation2] sm:$0xff] 0.0
    $region21: #{tpu_custom_call.1} parent=1 // pred_fallthru
      _
    %v45 = vld [vmem:[#allocation3] sm:$0xff]
    %v46 = vld [vmem:[#allocation3 + $0x8] sm:$0xff]
    %v47 = vld [vmem:[#allocation6] sm:$0xff]
    %v48 = vld [vmem:[#allocation6 + $0x8] sm:$0xff]
    %v49 = vsub.f32 %v45, %v47
    %v50 = vsub.f32 %v46, %v48
    %v51 = vmul.f32 %v49, %v49
    %v52 = vmul.f32 %v50, %v50
    %v53 = vld [vmem:[#allocation2] sm:$0xff]
    %v54 = vadd.f32 %v51, %v52
    %v55 = vadd.f32 %v53, %v54
    %56 = vst [vmem:[#allocation2] sm:$0xff] %v55
    // Predicated region
    $region22: #{tpu_custom_call.1} parent=1 // pred_check
      %p57 = pneg %p40
    $region23: #{tpu_custom_call.1} parent=1 // pred_check_branch
      %59 = sbr.rel (%p57) target = $region25
    $region24: #{tpu_custom_call.1} parent=1 // pred_region
      %v60 = vld [vmem:[#allocation2] sm:$0xff]
      %61 = vst [vmem:[#allocation8] sm:$0xff] %v60
    $region25: #{tpu_custom_call.1} parent=1 // pred_fallthru
      _
    // Predicated region
    $region26: #{tpu_custom_call.1} parent=1 // pred_check
      _
    $region27: #{tpu_custom_call.1} parent=1 // pred_check_branch
      %63 = sbr.rel (0) target = $region29
    $region28: #{tpu_custom_call.1} parent=1 // pred_region
      %s65 = ssub.s32 128, 128
      %66 = vsyncadd [#allocation5], %s65
      %s68 = sshll.u32 [#allocation8], 4
      %s69 = int_to_ptr.vmem [resolvable:$true] %s68
      %71 = dma.vmem_to_hbm [thread:$0]  %s69, 128, %s2, [#allocation5]
    $region29: #{tpu_custom_call.1} parent=1 // pred_fallthru
      _
    // Predicated region
    $region30: #{tpu_custom_call.1} parent=1 // pred_check
      _
    $region31: #{tpu_custom_call.1} parent=1 // pred_check_branch
      %73 = sbr.rel (0) target = $region33
    $region32: #{tpu_custom_call.1} parent=1 // pred_region
      %74 = dma.done [#allocation5], 128
    $region33: #{tpu_custom_call.1} parent=1 // pred_fallthru
      _
    %75 = vsyncpa [#allocation4], 1
    %76 = vsyncpa [#allocation7], 1
    %77 = vsyncpa [#allocation5], 1

</llo_original>
